<compile_context>
chip_gen: v7x
topology: tpu7x:2x2x1
jax: 0.10.0
libtpu: 0.0.40
codegen_flags: <defaults>
</compile_context>

<pallas_src>
import functools

import jax
import jax.numpy as jnp
from jax.experimental import pallas as pl
from jax.experimental.pallas import tpu as pltpu

LN_EPS = 1e-5  # PyTorch nn.LayerNorm default


def _round_up(x, n):
    return ((x + n - 1) // n) * n


def _ffn_kernel(x_ref, w1_ref, b1_ref, w2_ref, b2_ref, g_ref, beta_ref,
                o_ref, acc_ref):
    """One (row-tile, hidden-chunk) step of the position-wise FFN."""
    k = pl.program_id(1)
    nk = pl.num_programs(1)

    @pl.when(k == 0)
    def _():
        acc_ref[...] = jnp.zeros_like(acc_ref)

    x = x_ref[...]                                            # (TM, n_model)

    # ---- W1 chunk + bias + ReLU (MXU + VPU) ----
    h = jnp.dot(x.astype(w1_ref.dtype), w1_ref[...],
                preferred_element_type=jnp.float32)            # (TM, TK)
    h = jnp.maximum(h + b1_ref[...].astype(jnp.float32), 0.0)
    # TODO(synk): dropout omitted (identity in eval mode); a training-mode mask
    # would use pltpu.prng_seed / pltpu.prng_random_bits.

    # ---- partial W2 chunk, accumulated in f32 scratch ----
    acc_ref[...] += jnp.dot(h.astype(w2_ref.dtype), w2_ref[...],
                            preferred_element_type=jnp.float32)  # (TM, n_model)

    # ---- epilogue on the last hidden chunk: bias + residual + LayerNorm ----
    @pl.when(k == nk - 1)
    def _():
        z = acc_ref[...] + b2_ref[...].astype(jnp.float32) + x.astype(jnp.float32)
        # single-pass statistics: var = E[z^2] - mean^2
        mean = jnp.mean(z, axis=-1, keepdims=True)
        mean2 = jnp.mean(z * z, axis=-1, keepdims=True)
        var = mean2 - mean * mean
        zn = (z - mean) * jax.lax.rsqrt(var + LN_EPS)
        out = zn * g_ref[...].astype(jnp.float32) + beta_ref[...].astype(jnp.float32)
        o_ref[...] = out.astype(o_ref.dtype)


def _pick_block_k(n_inner, block_k):
    """Largest multiple of 128 <= block_k dividing n_inner, else n_inner (no K-tiling)."""
    if n_inner <= block_k:
        return n_inner
    bk = (block_k // 128) * 128
    while bk >= 128:
        if n_inner % bk == 0:
            return bk
        bk -= 128
    return n_inner


@functools.partial(jax.jit,
                   static_argnames=("block_rows", "block_k", "use_bf16_matmul"))
def pos_wise_ffn(x, w1, b1, w2, b2, gamma, beta, *,
                 block_rows=256, block_k=512, use_bf16_matmul=False):
    """x: (batch, seq, n_model).  Weights stored as (in, out) so the kernel does x @ W."""
    batch, seq, n_model = x.shape
    n_inner = w1.shape[1]
    m = batch * seq

    # Row tile: MXU-sized, multiple of 8 sublanes, no larger than needed.
    tm = min(_round_up(block_rows, 8), _round_up(m, 8))
    m_pad = _round_up(m, tm)
    # Hidden-dim tile (lane constraint: multiple of 128 unless it is the full dim).
    tk = _pick_block_k(n_inner, block_k)

    x2d = x.reshape(m, n_model)
    if m_pad != m:
        x2d = jnp.pad(x2d, ((0, m_pad - m), (0, 0)))

    # Optionally stream matmul operands as bf16 (halves weight HBM/VMEM traffic);
    # accumulation stays f32 on the MXU, epilogue stays f32.
    w_dtype = jnp.bfloat16 if use_bf16_matmul else w1.dtype
    w1c = w1.astype(w_dtype)
    w2c = w2.astype(w_dtype)

    # Biases / LN params as (1, feature) rows so they broadcast over the tile.
    b1_2d = b1.reshape(1, n_inner).astype(jnp.float32)
    b2_2d = b2.reshape(1, n_model).astype(jnp.float32)
    g_2d = gamma.reshape(1, n_model).astype(jnp.float32)
    beta_2d = beta.reshape(1, n_model).astype(jnp.float32)

    grid = (m_pad // tm, n_inner // tk)

    # Raise the scoped VMEM limit to cover the chosen tiles (double-buffered
    # inputs/outputs + f32 accumulator) with ~30% headroom, capped at 64 MiB.
    w_bytes = jnp.dtype(w_dtype).itemsize
    x_bytes = x.dtype.itemsize
    est = (2 * tm * n_model * x_bytes                        # x row tile
           + 2 * (n_model * tk + tk * n_model) * w_bytes     # w1 / w2 chunks
           + 2 * (tk + 3 * n_model) * 4                      # b1 chunk, b2, gamma, beta
           + 2 * tm * n_model * x_bytes                      # output tile
           + tm * n_model * 4                                # f32 accumulator scratch
           + tm * tk * 4)                                    # hidden activation temp
    vmem_limit = min(max(32 * 1024 * 1024, int(est * 1.3)), 64 * 1024 * 1024)

    out2d = pl.pallas_call(
        _ffn_kernel,
        out_shape=jax.ShapeDtypeStruct((m_pad, n_model), x.dtype),
        grid=grid,
        in_specs=[
            pl.BlockSpec((tm, n_model), lambda i, k: (i, 0)),   # x row tile (resident over k)
            pl.BlockSpec((n_model, tk), lambda i, k: (0, k)),   # w1 chunk
            pl.BlockSpec((1, tk), lambda i, k: (0, k)),         # b1 chunk
            pl.BlockSpec((tk, n_model), lambda i, k: (k, 0)),   # w2 chunk
            pl.BlockSpec((1, n_model), lambda i, k: (0, 0)),    # b2
            pl.BlockSpec((1, n_model), lambda i, k: (0, 0)),    # gamma
            pl.BlockSpec((1, n_model), lambda i, k: (0, 0)),    # beta
        ],
        out_specs=pl.BlockSpec((tm, n_model), lambda i, k: (i, 0)),
        scratch_shapes=[pltpu.VMEM((tm, n_model), jnp.float32)],
        compiler_params=pltpu.CompilerParams(
            dimension_semantics=("parallel", "arbitrary"),
            vmem_limit_bytes=vmem_limit),
    )(x2d, w1c, b1_2d, w2c, b2_2d, g_2d, beta_2d)

    if m_pad != m:
        out2d = out2d[:m]
    return out2d.reshape(batch, seq, n_model)


def _orthogonal(key, rows, cols, dtype=jnp.float32):
    """Deterministic orthogonal init (rows x cols), matching nn.init.orthogonal_ semantics."""
    n = max(rows, cols)
    a = jax.random.normal(key, (n, n), dtype=jnp.float32)
    q, r = jnp.linalg.qr(a)
    q = q * jnp.sign(jnp.diag(r))[None, :]
    return q[:rows, :cols].astype(dtype)


def _reference(x, w1, b1, w2, b2, gamma, beta):
    h = jnp.maximum(x @ w1 + b1, 0.0)
    y = h @ w2 + b2
    z = y + x
    mean = jnp.mean(z, axis=-1, keepdims=True)
    var = jnp.mean((z - mean) ** 2, axis=-1, keepdims=True)
    return (z - mean) / jnp.sqrt(var + LN_EPS) * gamma + beta


if __name__ == "__main__":
    key = jax.random.PRNGKey(0)

    # ---- test 1: toy module shapes, f32 matmuls, tight tolerance ----
    k_x, k_w1, k_w2, key = jax.random.split(key, 4)
    batch, seq, n_model, n_inner = 2, 8, 32, 64
    x = jax.random.normal(k_x, (batch, seq, n_model), dtype=jnp.float32)
    # PyTorch Linear stores weight as (out, in); keep the transposed (in, out)
    # form so the kernel computes x @ W. Orthogonal init, zero bias (reset_parameters).
    w1 = _orthogonal(k_w1, n_inner, n_model).T        # (n_model, n_inner)
    w2 = _orthogonal(k_w2, n_model, n_inner).T        # (n_inner, n_model)
    b1 = jnp.zeros((n_inner,), jnp.float32)
    b2 = jnp.zeros((n_model,), jnp.float32)
    gamma = jnp.ones((n_model,), jnp.float32)
    beta = jnp.zeros((n_model,), jnp.float32)

    out = jax.block_until_ready(
        pos_wise_ffn(x, w1, b1, w2, b2, gamma, beta, use_bf16_matmul=False))
    ref = _reference(x, w1, b1, w2, b2, gamma, beta)
    assert out.shape == x.shape
    assert float(jnp.max(jnp.abs(out - ref))) < 1e-4, "f32 kernel mismatch vs reference"

    # ---- test 2: lane-dense shapes exercising row padding, hidden-dim (K)
    #      tiling with the f32 accumulator, and bf16 MXU operands ----
    k_x, k_w1, k_w2, key = jax.random.split(key, 4)
    batch, seq, n_model, n_inner = 2, 72, 128, 256
    x = jax.random.normal(k_x, (batch, seq, n_model), dtype=jnp.float32)
    w1 = _orthogonal(k_w1, n_inner, n_model).T
    w2 = _orthogonal(k_w2, n_model, n_inner).T
    b1 = jnp.zeros((n_inner,), jnp.float32)
    b2 = jnp.zeros((n_model,), jnp.float32)
    gamma = jnp.ones((n_model,), jnp.float32)
    beta = jnp.zeros((n_model,), jnp.float32)

    out = jax.block_until_ready(
        pos_wise_ffn(x, w1, b1, w2, b2, gamma, beta,
                     block_rows=64, block_k=128, use_bf16_matmul=True))
    ref = _reference(x, w1, b1, w2, b2, gamma, beta)
    assert out.shape == x.shape
    assert float(jnp.max(jnp.abs(out - ref))) < 1e-1, "bf16 kernel mismatch vs reference"

    print("KERNEL_OK")
</pallas_src>

<mosaic_0001>
module attributes {stable_mosaic.version = 11 : i64} {
  func.func @_ffn_kernel(%arg0: i32, %arg1: i32, %arg2: memref<16x32xf32, #tpu.memory_space<vmem>>, %arg3: memref<32x64xf32, #tpu.memory_space<vmem>>, %arg4: memref<1x64xf32, #tpu.memory_space<vmem>>, %arg5: memref<64x32xf32, #tpu.memory_space<vmem>>, %arg6: memref<1x32xf32, #tpu.memory_space<vmem>>, %arg7: memref<1x32xf32, #tpu.memory_space<vmem>>, %arg8: memref<1x32xf32, #tpu.memory_space<vmem>>, %arg9: memref<16x32xf32, #tpu.memory_space<vmem>>, %arg10: memref<16x32xf32, #tpu.memory_space<vmem>>) attributes {dimension_semantics = [#tpu.dimension_semantics<parallel>, #tpu.dimension_semantics<arbitrary>], iteration_bounds = array<i64: 1, 1>, scalar_prefetch = 0 : i64, scratch_operands = 1 : i64, tpu.core_type = #tpu.core_type<tc>, window_params = [{transform_indices = @transform_0, window_bounds = array<i64: 16, 32>}, {transform_indices = @transform_1, window_bounds = array<i64: 32, 64>}, {transform_indices = @transform_2, window_bounds = array<i64: 1, 64>}, {transform_indices = @transform_3, window_bounds = array<i64: 64, 32>}, {pipeline_mode = #tpu.pipeline_mode<synchronous>, transform_indices = @transform_4, window_bounds = array<i64: 1, 32>}, {pipeline_mode = #tpu.pipeline_mode<synchronous>, transform_indices = @transform_5, window_bounds = array<i64: 1, 32>}, {pipeline_mode = #tpu.pipeline_mode<synchronous>, transform_indices = @transform_6, window_bounds = array<i64: 1, 32>}, {transform_indices = @transform_7, window_bounds = array<i64: 16, 32>}]} {
    %c0_i32 = arith.constant 0 : i32
    %0 = arith.cmpi eq, %arg1, %c0_i32 : i32
    %1 = arith.extui %0 : i1 to i32
    %c0_i32_0 = arith.constant 0 : i32
    %2 = arith.cmpi ne, %1, %c0_i32_0 : i32
    scf.if %2 {
      %cst_16 = arith.constant 0.000000e+00 : f32
      %19 = vector.broadcast %cst_16 : f32 to vector<16x32xf32>
      %c0_17 = arith.constant 0 : index
      %c0_18 = arith.constant 0 : index
      %20 = vector.load %arg10[%c0_17, %c0_18] : memref<16x32xf32, #tpu.memory_space<vmem>>, vector<16x32xf32>
      tpu.vector_store %arg10[%c0_17, %c0_18], %19 {strides = array<i32>} : memref<16x32xf32, #tpu.memory_space<vmem>>, vector<16x32xf32>,
    } else {
    }
    %c0 = arith.constant 0 : index
    %c0_1 = arith.constant 0 : index
    %3 = vector.load %arg2[%c0, %c0_1] : memref<16x32xf32, #tpu.memory_space<vmem>>, vector<16x32xf32>
    %c0_2 = arith.constant 0 : index
    %c0_3 = arith.constant 0 : index
    %4 = vector.load %arg3[%c0_2, %c0_3] : memref<32x64xf32, #tpu.memory_space<vmem>>, vector<32x64xf32>
    %cst = arith.constant dense<0.000000e+00> : vector<16x64xf32>
    %5 = tpu.matmul %3, %4, %cst {dimension_numbers = #tpu.dot_dimension_numbers<[1], [0], [0], [1], [0, 0, 1, 1], [], []>} : vector<16x32xf32>, vector<32x64xf32>, vector<16x64xf32> -> vector<16x64xf32>
    %c0_4 = arith.constant 0 : index
    %c0_5 = arith.constant 0 : index
    %6 = vector.load %arg4[%c0_4, %c0_5] : memref<1x64xf32, #tpu.memory_space<vmem>>, vector<1x64xf32>
    %7 = vector.broadcast %6 : vector<1x64xf32> to vector<16x64xf32>
    %8 = arith.addf %5, %7 : vector<16x64xf32>
    %cst_6 = arith.constant 0.000000e+00 : f32
    %9 = vector.broadcast %cst_6 : f32 to vector<16x64xf32>
    %10 = arith.maximumf %8, %9 : vector<16x64xf32>
    %c0_7 = arith.constant 0 : index
    %c0_8 = arith.constant 0 : index
    %11 = vector.load %arg10[%c0_7, %c0_8] : memref<16x32xf32, #tpu.memory_space<vmem>>, vector<16x32xf32>
    %c0_9 = arith.constant 0 : index
    %c0_10 = arith.constant 0 : index
    %12 = vector.load %arg5[%c0_9, %c0_10] : memref<64x32xf32, #tpu.memory_space<vmem>>, vector<64x32xf32>
    %cst_11 = arith.constant dense<0.000000e+00> : vector<16x32xf32>
    %13 = tpu.matmul %10, %12, %cst_11 {dimension_numbers = #tpu.dot_dimension_numbers<[1], [0], [0], [1], [0, 0, 1, 1], [], []>} : vector<16x64xf32>, vector<64x32xf32>, vector<16x32xf32> -> vector<16x32xf32>
    %14 = arith.addf %11, %13 : vector<16x32xf32>
    %c0_12 = arith.constant 0 : index
    %c0_13 = arith.constant 0 : index
    %15 = vector.load %arg10[%c0_12, %c0_13] : memref<16x32xf32, #tpu.memory_space<vmem>>, vector<16x32xf32>
    tpu.vector_store %arg10[%c0_12, %c0_13], %14 {strides = array<i32>} : memref<16x32xf32, #tpu.memory_space<vmem>>, vector<16x32xf32>,
    %c0_i32_14 = arith.constant 0 : i32
    %16 = arith.cmpi eq, %arg1, %c0_i32_14 : i32
    %17 = arith.extui %16 : i1 to i32
    %c0_i32_15 = arith.constant 0 : i32
    %18 = arith.cmpi ne, %17, %c0_i32_15 : i32
    scf.if %18 {
      %c0_16 = arith.constant 0 : index
      %c0_17 = arith.constant 0 : index
      %19 = vector.load %arg10[%c0_16, %c0_17] : memref<16x32xf32, #tpu.memory_space<vmem>>, vector<16x32xf32>
      %c0_18 = arith.constant 0 : index
      %c0_19 = arith.constant 0 : index
      %20 = vector.load %arg6[%c0_18, %c0_19] : memref<1x32xf32, #tpu.memory_space<vmem>>, vector<1x32xf32>
      %21 = vector.broadcast %20 : vector<1x32xf32> to vector<16x32xf32>
      %22 = arith.addf %19, %21 : vector<16x32xf32>
      %23 = arith.addf %22, %3 : vector<16x32xf32>
      %cst_20 = arith.constant dense<0.000000e+00> : vector<16xf32>
      %24 = vector.multi_reduction <add>, %23, %cst_20 [1] : vector<16x32xf32> to vector<16xf32>
      %25 = vector.shape_cast %24 : vector<16xf32> to vector<16x1xf32>
      %cst_21 = arith.constant 3.200000e+01 : f32
      %26 = vector.broadcast %cst_21 : f32 to vector<16x1xf32>
      %27 = arith.divf %25, %26 : vector<16x1xf32>
      %28 = arith.mulf %23, %23 : vector<16x32xf32>
      %cst_22 = arith.constant dense<0.000000e+00> : vector<16xf32>
      %29 = vector.multi_reduction <add>, %28, %cst_22 [1] : vector<16x32xf32> to vector<16xf32>
      %30 = vector.shape_cast %29 : vector<16xf32> to vector<16x1xf32>
      %cst_23 = arith.constant 3.200000e+01 : f32
      %31 = vector.broadcast %cst_23 : f32 to vector<16x1xf32>
      %32 = arith.divf %30, %31 : vector<16x1xf32>
      %33 = arith.mulf %27, %27 : vector<16x1xf32>
      %34 = arith.subf %32, %33 : vector<16x1xf32>
      %35 = vector.broadcast %27 : vector<16x1xf32> to vector<16x32xf32>
      %36 = arith.subf %23, %35 : vector<16x32xf32>
      %cst_24 = arith.constant 9.99999974E-6 : f32
      %37 = vector.broadcast %cst_24 : f32 to vector<16x1xf32>
      %38 = arith.addf %34, %37 : vector<16x1xf32>
      %39 = math.rsqrt %38 : vector<16x1xf32>
      %40 = vector.broadcast %39 : vector<16x1xf32> to vector<16x32xf32>
      %41 = arith.mulf %36, %40 : vector<16x32xf32>
      %c0_25 = arith.constant 0 : index
      %c0_26 = arith.constant 0 : index
      %42 = vector.load %arg7[%c0_25, %c0_26] : memref<1x32xf32, #tpu.memory_space<vmem>>, vector<1x32xf32>
      %43 = vector.broadcast %42 : vector<1x32xf32> to vector<16x32xf32>
      %44 = arith.mulf %41, %43 : vector<16x32xf32>
      %c0_27 = arith.constant 0 : index
      %c0_28 = arith.constant 0 : index
      %45 = vector.load %arg8[%c0_27, %c0_28] : memref<1x32xf32, #tpu.memory_space<vmem>>, vector<1x32xf32>
      %46 = vector.broadcast %45 : vector<1x32xf32> to vector<16x32xf32>
      %47 = arith.addf %44, %46 : vector<16x32xf32>
      %c0_29 = arith.constant 0 : index
      %c0_30 = arith.constant 0 : index
      %48 = vector.load %arg9[%c0_29, %c0_30] : memref<16x32xf32, #tpu.memory_space<vmem>>, vector<16x32xf32>
      tpu.vector_store %arg9[%c0_29, %c0_30], %47 {strides = array<i32>} : memref<16x32xf32, #tpu.memory_space<vmem>>, vector<16x32xf32>,
    } else {
    }
    return
  }
  func.func @transform_0(%arg0: i32, %arg1: i32) -> (i32, i32) {
    %c0_i32 = arith.constant 0 : i32
    %c0_i32_0 = arith.constant 0 : i32
    return %arg0, %c0_i32 : i32, i32
  }
  func.func @transform_1(%arg0: i32, %arg1: i32) -> (i32, i32) {
    %c0_i32 = arith.constant 0 : i32
    %c0_i32_0 = arith.constant 0 : i32
    return %c0_i32, %arg1 : i32, i32
  }
  func.func @transform_2(%arg0: i32, %arg1: i32) -> (i32, i32) {
    %c0_i32 = arith.constant 0 : i32
    %c0_i32_0 = arith.constant 0 : i32
    return %c0_i32, %arg1 : i32, i32
  }
  func.func @transform_3(%arg0: i32, %arg1: i32) -> (i32, i32) {
    %c0_i32 = arith.constant 0 : i32
    %c0_i32_0 = arith.constant 0 : i32
    return %arg1, %c0_i32 : i32, i32
  }
  func.func @transform_4(%arg0: i32, %arg1: i32) -> (i32, i32) {
    %c0_i32 = arith.constant 0 : i32
    %c0_i32_0 = arith.constant 0 : i32
    %c0_i32_1 = arith.constant 0 : i32
    return %c0_i32, %c0_i32_0 : i32, i32
  }
  func.func @transform_5(%arg0: i32, %arg1: i32) -> (i32, i32) {
    %c0_i32 = arith.constant 0 : i32
    %c0_i32_0 = arith.constant 0 : i32
    %c0_i32_1 = arith.constant 0 : i32
    return %c0_i32, %c0_i32_0 : i32, i32
  }
  func.func @transform_6(%arg0: i32, %arg1: i32) -> (i32, i32) {
    %c0_i32 = arith.constant 0 : i32
    %c0_i32_0 = arith.constant 0 : i32
    %c0_i32_1 = arith.constant 0 : i32
    return %c0_i32, %c0_i32_0 : i32, i32
  }
  func.func @transform_7(%arg0: i32, %arg1: i32) -> (i32, i32) {
    %c0_i32 = arith.constant 0 : i32
    %c0_i32_0 = arith.constant 0 : i32
    return %arg0, %c0_i32 : i32, i32
  }
}

</mosaic_0001>

<llo_original>
// kernel: pos_wise_ffn.1
$region0: #{pos_wise_ffn.1}
  #allocation0 [shape = 'u32[]', space=smem, size = 0x4, offset = 0x4, fixed_abs, tag = 'smem constant byte address 0x4 - core index']
  #allocation1 [shape = 'u32[144,128]{1,0:T(1,128)}', space=vmem, size = 0x12000, scoped, tag = 'internal scratch']
  #allocation2 [shape = 'f32[16,32]{1,0:T(8,128)}', space=vmem, size = 0x2000, scoped, tag = 'scratch operand']
  %s0 = inlined_call_operand.vmem [shape: f32[16,32], index: 0, kind: input, shape index: {}]
  %s1 = inlined_call_operand.vmem [shape: f32[32,64], index: 1, kind: input, shape index: {}]
  %s2 = inlined_call_operand.vmem [shape: f32[1,64], index: 2, kind: input, shape index: {}]
  %s3 = inlined_call_operand.vmem [shape: f32[64,32], index: 3, kind: input, shape index: {}]
  %s4 = inlined_call_operand.vmem [shape: f32[1,32], index: 4, kind: input, shape index: {}]
  %s5 = inlined_call_operand.vmem [shape: f32[1,32], index: 5, kind: input, shape index: {}]
  %s6 = inlined_call_operand.vmem [shape: f32[1,32], index: 6, kind: input, shape index: {}]
  %s7 = inlined_call_operand.hbm [shape: f32[16,32], index: 7, kind: output, shape index: {}]
  %s8 = sld [smem:[#allocation0]]
  $region46: #{pos_wise_ffn.1} parent=0
    _
  %s10 = ssub.s32 1, %s8
  %s11 = scalar_select 0, %s10, %s8
  $region1: #{pos_wise_ffn.1} parent=0
    #allocation3 [shape = 'u8[8192]{0}', space=vmem, size = 0x2000, scoped, tag = 'output window, operand 0, single buffered']
    #allocation4 [shape = 's32[1]{0}', space=sflag, size = 0x4, scoped, tag = 'scoped memory for pos_wise_ffn.1']
    %12 = vsyncpa [#allocation4], 0
    // Predicated region
    $region2: #{pos_wise_ffn.1} parent=1 // pred_check
      _
    $region3: #{pos_wise_ffn.1} parent=1 // pred_check_branch
      %14 = sbr.rel (0) target = $region5
    $region4: #{pos_wise_ffn.1} parent=1 // pred_region
      _
    $region5: #{pos_wise_ffn.1} parent=1 // pred_fallthru
      _
    // Predicated region
    $region6: #{pos_wise_ffn.1} parent=1 // pred_check
      _
    $region7: #{pos_wise_ffn.1} parent=1 // pred_check_branch
      %16 = sbr.rel (0) target = $region9
    $region8: #{pos_wise_ffn.1} parent=1 // pred_region
      _
    $region9: #{pos_wise_ffn.1} parent=1 // pred_fallthru
      _
    // Predicated region
    $region10: #{pos_wise_ffn.1} parent=1 // pred_check
      _
    $region11: #{pos_wise_ffn.1} parent=1 // pred_check_branch
      %18 = sbr.rel (0) target = $region13
    $region12: #{pos_wise_ffn.1} parent=1 // pred_region
      _
    $region13: #{pos_wise_ffn.1} parent=1 // pred_fallthru
      _
    // Predicated region
    $region14: #{pos_wise_ffn.1} parent=1 // pred_check
      _
    $region15: #{pos_wise_ffn.1} parent=1 // pred_check_branch
      %20 = sbr.rel (0) target = $region17
    $region16: #{pos_wise_ffn.1} parent=1 // pred_region
      _
    $region17: #{pos_wise_ffn.1} parent=1 // pred_fallthru
      _
    // Predicated region
    $region18: #{pos_wise_ffn.1} parent=1 // pred_check
      _
    $region19: #{pos_wise_ffn.1} parent=1 // pred_check_branch
      %22 = sbr.rel (0) target = $region21
    $region20: #{pos_wise_ffn.1} parent=1 // pred_region
      _
    $region21: #{pos_wise_ffn.1} parent=1 // pred_fallthru
      _
    // Predicated region
    $region22: #{pos_wise_ffn.1} parent=1 // pred_check
      _
    $region23: #{pos_wise_ffn.1} parent=1 // pred_check_branch
      %24 = sbr.rel (0) target = $region25
    $region24: #{pos_wise_ffn.1} parent=1 // pred_region
      _
    $region25: #{pos_wise_ffn.1} parent=1 // pred_fallthru
      _
    // Predicated region
    $region26: #{pos_wise_ffn.1} parent=1 // pred_check
      _
    $region27: #{pos_wise_ffn.1} parent=1 // pred_check_branch
      %26 = sbr.rel (0) target = $region29
    $region28: #{pos_wise_ffn.1} parent=1 // pred_region
      _
    $region29: #{pos_wise_ffn.1} parent=1 // pred_fallthru
      _
    %p27 = scmp.eq.s32.totalorder 0, 0
    // Predicated region
    $region30: #{pos_wise_ffn.1} parent=1 // pred_check
      %p28 = pneg %p27
    $region31: #{pos_wise_ffn.1} parent=1 // pred_check_branch
      %30 = sbr.rel (%p28) target = $region33
    $region32: #{pos_wise_ffn.1} parent=1 // pred_region
      %vm31 = vcmask 261120
      %32 = vst.msk [vmem:[#allocation2] sm:$0xff] %vm31, 0.0
      %33 = vst.msk [vmem:[#allocation2 + $0x8] sm:$0xff] %vm31, 0.0
    $region33: #{pos_wise_ffn.1} parent=1 // pred_fallthru
      _
    %v34 = vld [vmem:[%s0] sm:$0xff]
    %v35 = vld [vmem:[%s0 + $0x8] sm:$0xff]
    %v36 = vld [vmem:[%s1] sm:$0xff]
    %v37 = vld [vmem:[%s1 + $0x8] sm:$0xff]
    %v38 = vld [vmem:[%s1 + $0x10] sm:$0xff]
    %v39 = vld [vmem:[%s1 + $0x18] sm:$0xff]
    %v40 = vld [vmem:[%s2] sm:$0x1]
    %v42 = vlaneseq
    %v43 = vshrl.u32 %v42, 7
    %v44 = vsub.s32 0, %v43
    %v45 = vrot.slane %v40, %v44
    %vm47 = vcmask 261120
    %v49 = vsel %vm47, %v34, 0
    %v52 = vsel %vm47, %v35, 0
    %54 = vmatprep.subr.mxu0 0.0
    %55 = vmatpush1.msra.mxu0 %v36
    %56 = vmatprep.subr.mxu0 0.0
    %57 = vmatpush1.msra.mxu0 %v37
    %58 = vmatprep.subr.mxu0 0.0
    %59 = vmatpush1.msra.mxu0 %v38
    %60 = vmatprep.subr.mxu0 0.0
    %61 = vmatpush1.msra.mxu0 %v39
    %62 = vmatprep.subr.mxu0 0.0
    %63 = vmatpush1.msra.mxu0 0.0
    %64 = vmatprep.subr.mxu0 0.0
    %65 = vmatpush1.msra.mxu0 0.0
    %66 = vmatprep.subr.mxu0 0.0
    %67 = vmatpush1.msra.mxu0 0.0
    %68 = vmatprep.subr.mxu0 0.0
    %69 = vmatpush1.msra.mxu0 0.0
    %70 = vmatprep.subr.mxu0 0.0
    %71 = vmatpush1.msra.mxu0 0.0
    %72 = vmatprep.subr.mxu0 0.0
    %73 = vmatpush1.msra.mxu0 0.0
    %74 = vmatprep.subr.mxu0 0.0
    %75 = vmatpush1.msra.mxu0 0.0
    %76 = vmatprep.subr.mxu0 0.0
    %77 = vmatpush1.msra.mxu0 0.0
    %78 = vmatprep.subr.mxu0 0.0
    %79 = vmatpush1.msra.mxu0 0.0
    %80 = vmatprep.subr.mxu0 0.0
    %81 = vmatpush1.msra.mxu0 0.0
    %82 = vmatprep.subr.mxu0 0.0
    %83 = vmatpush1.msra.mxu0 0.0
    %84 = vmatprep.subr.mxu0 0.0
    %85 = vmatpush1.msra.mxu0 0.0
    %86 = vmatprep.subr.mxu0 0.0
    %87 = vmatpush1.msra.mxu0 0.0
    %88 = vmatprep.subr.mxu0 0.0
    %89 = vmatpush1.msra.mxu0 0.0
    %90 = vmatprep.subr.mxu0 0.0
    %91 = vmatpush1.msra.mxu0 0.0
    %92 = vmatprep.subr.mxu0 0.0
    %93 = vmatpush1.msra.mxu0 0.0
    %94 = vmatprep.subr.mxu0 0.0
    %95 = vmatpush1.msra.mxu0 0.0
    %96 = vmatprep.subr.mxu0 0.0
    %97 = vmatpush1.msra.mxu0 0.0
    %98 = vmatprep.subr.mxu0 0.0
    %99 = vmatpush1.msra.mxu0 0.0
    %100 = vmatprep.subr.mxu0 0.0
    %101 = vmatpush1.msra.mxu0 0.0
    %102 = vmatprep.subr.mxu0 0.0
    %103 = vmatpush1.msra.mxu0 0.0
    %104 = vmatprep.subr.mxu0 0.0
    %105 = vmatpush1.msra.mxu0 0.0
    %106 = vmatprep.subr.mxu0 0.0
    %107 = vmatpush1.msra.mxu0 0.0
    %108 = vmatprep.subr.mxu0 0.0
    %109 = vmatpush1.msra.mxu0 0.0
    %110 = vmatprep.subr.mxu0 0.0
    %111 = vmatpush1.msra.mxu0 0.0
    %112 = vmatprep.subr.mxu0 0.0
    %113 = vmatpush1.msra.mxu0 0.0
    %114 = vmatprep.subr.mxu0 0.0
    %115 = vmatpush1.msra.mxu0 0.0
    %116 = vmatprep.subr.mxu0 0.0
    %117 = vmatpush1.msra.mxu0 0.0
    %118 = vmatprep.mubr.f32.mxu0 0.0
    %119 = vmatmul.mubr.f32.gmra.mrb[0].mxu0 %v49
    %v120 = vpop.f32.mrb[0].mxu0
    %v121 = vadd.f32 %v45, %v120
    %v122 = vpop.f32.mrb[0].mxu0
    %123 = vmatprep.mubr.f32.mxu0 0.0
    %124 = vmatmul.mubr.f32.gmra.mrb[0].mxu0 %v52
    %v125 = vpop.f32.mrb[0].mxu0
    %v126 = vadd.f32 %v45, %v125
    %v127 = vpop.f32.mrb[0].mxu0
    %128 = vdwg.mxu0
    %v129 = vmax.f32 %v121, 0.0
    %v130 = vmax.f32 %v126, 0.0
    %v131 = vld [vmem:[#allocation2] sm:$0xff]
    %v132 = vld [vmem:[#allocation2 + $0x8] sm:$0xff]
    %v133 = vld [vmem:[%s3] sm:$0xff]
    %v134 = vld [vmem:[%s3 + $0x8] sm:$0xff]
    %v135 = vld [vmem:[%s3 + $0x10] sm:$0xff]
    %v136 = vld [vmem:[%s3 + $0x18] sm:$0xff]
    %v137 = vld [vmem:[%s3 + $0x20] sm:$0xff]
    %v138 = vld [vmem:[%s3 + $0x28] sm:$0xff]
    %v139 = vld [vmem:[%s3 + $0x30] sm:$0xff]
    %v140 = vld [vmem:[%s3 + $0x38] sm:$0xff]
    %vm141 = vcmask 523264
    %v143 = vsel %vm141, %v129, 0
    %v146 = vsel %vm141, %v130, 0
    %148 = vmatprep.subr.mxu0 0.0
    %149 = vmatpush1.msra.mxu0 %v133
    %150 = vmatprep.subr.mxu0 0.0
    %151 = vmatpush1.msra.mxu0 %v134
    %152 = vmatprep.subr.mxu0 0.0
    %153 = vmatpush1.msra.mxu0 %v135
    %154 = vmatprep.subr.mxu0 0.0
    %155 = vmatpush1.msra.mxu0 %v136
    %156 = vmatprep.subr.mxu0 0.0
    %157 = vmatpush1.msra.mxu0 %v137
    %158 = vmatprep.subr.mxu0 0.0
    %159 = vmatpush1.msra.mxu0 %v138
    %160 = vmatprep.subr.mxu0 0.0
    %161 = vmatpush1.msra.mxu0 %v139
    %162 = vmatprep.subr.mxu0 0.0
    %163 = vmatpush1.msra.mxu0 %v140
    %164 = vmatprep.subr.mxu0 0.0
    %165 = vmatpush1.msra.mxu0 0.0
    %166 = vmatprep.subr.mxu0 0.0
    %167 = vmatpush1.msra.mxu0 0.0
    %168 = vmatprep.subr.mxu0 0.0
    %169 = vmatpush1.msra.mxu0 0.0
    %170 = vmatprep.subr.mxu0 0.0
    %171 = vmatpush1.msra.mxu0 0.0
    %172 = vmatprep.subr.mxu0 0.0
    %173 = vmatpush1.msra.mxu0 0.0
    %174 = vmatprep.subr.mxu0 0.0
    %175 = vmatpush1.msra.mxu0 0.0
    %176 = vmatprep.subr.mxu0 0.0
    %177 = vmatpush1.msra.mxu0 0.0
    %178 = vmatprep.subr.mxu0 0.0
    %179 = vmatpush1.msra.mxu0 0.0
    %180 = vmatprep.subr.mxu0 0.0
    %181 = vmatpush1.msra.mxu0 0.0
    %182 = vmatprep.subr.mxu0 0.0
    %183 = vmatpush1.msra.mxu0 0.0
    %184 = vmatprep.subr.mxu0 0.0
    %185 = vmatpush1.msra.mxu0 0.0
    %186 = vmatprep.subr.mxu0 0.0
    %187 = vmatpush1.msra.mxu0 0.0
    %188 = vmatprep.subr.mxu0 0.0
    %189 = vmatpush1.msra.mxu0 0.0
    %190 = vmatprep.subr.mxu0 0.0
    %191 = vmatpush1.msra.mxu0 0.0
    %192 = vmatprep.subr.mxu0 0.0
    %193 = vmatpush1.msra.mxu0 0.0
    %194 = vmatprep.subr.mxu0 0.0
    %195 = vmatpush1.msra.mxu0 0.0
    %196 = vmatprep.subr.mxu0 0.0
    %197 = vmatpush1.msra.mxu0 0.0
    %198 = vmatprep.subr.mxu0 0.0
    %199 = vmatpush1.msra.mxu0 0.0
    %200 = vmatprep.subr.mxu0 0.0
    %201 = vmatpush1.msra.mxu0 0.0
    %202 = vmatprep.subr.mxu0 0.0
    %203 = vmatpush1.msra.mxu0 0.0
    %204 = vmatprep.subr.mxu0 0.0
    %205 = vmatpush1.msra.mxu0 0.0
    %206 = vmatprep.subr.mxu0 0.0
    %207 = vmatpush1.msra.mxu0 0.0
    %208 = vmatprep.subr.mxu0 0.0
    %209 = vmatpush1.msra.mxu0 0.0
    %210 = vmatprep.subr.mxu0 0.0
    %211 = vmatpush1.msra.mxu0 0.0
    %212 = vmatprep.mubr.f32.mxu0 0.0
    %213 = vmatmul.mubr.f32.gmra.mrb[0].mxu0 %v143
    %v214 = vpop.f32.mrb[0].mxu0
    %v215 = vadd.f32 0.0, %v214
    %v216 = vpop.f32.mrb[0].mxu0
    %217 = vmatprep.mubr.f32.mxu0 0.0
    %218 = vmatmul.mubr.f32.gmra.mrb[0].mxu0 %v146
    %v219 = vpop.f32.mrb[0].mxu0
    %v220 = vadd.f32 0.0, %v219
    %v221 = vpop.f32.mrb[0].mxu0
    %222 = vdwg.mxu0
    %v223 = vadd.f32 %v131, %v215
    %v224 = vadd.f32 %v132, %v220
    %225 = vst.msk [vmem:[#allocation2] sm:$0xff] %vm47, %v223
    %226 = vst.msk [vmem:[#allocation2 + $0x8] sm:$0xff] %vm47, %v224
    // Predicated region
    $region34: #{pos_wise_ffn.1} parent=1 // pred_check
      %p227 = pneg %p27
    $region35: #{pos_wise_ffn.1} parent=1 // pred_check_branch
      %229 = sbr.rel (%p227) target = $region37
    $region36: #{pos_wise_ffn.1} parent=1 // pred_region
      %v230 = vld [vmem:[#allocation2] sm:$0xff]
      %v231 = vld [vmem:[#allocation2 + $0x8] sm:$0xff]
      %v232 = vld [vmem:[%s4] sm:$0x1]
      %v234 = vlaneseq
      %v235 = vshrl.u32 %v234, 7
      %v236 = vsub.s32 0, %v235
      %v237 = vrot.slane %v232, %v236
      %v239 = vadd.f32 %v230, %v237
      %v240 = vadd.f32 %v231, %v237
      %v241 = vadd.f32 %v239, %v34
      %v242 = vadd.f32 %v240, %v35
      %v243 = vsel %vm47, %v241, 0.0
      %244 = vadd.xlane.f32.xlu0 %v243
      %v245 = vpop.xlane.xlu0 %244
      %v246 = vsel %vm47, %v242, 0.0
      %247 = vadd.xlane.f32.xlu0 %v246
      %v248 = vpop.xlane.xlu0 %247
      %v249 = vrcp.pop 32.0
      %v250 = vmul.f32 %v245, %v249
      %v251 = vmul.f32 %v248, %v249
      %v252 = vmul.f32 %v241, %v241
      %v253 = vmul.f32 %v242, %v242
      %v254 = vsel %vm47, %v252, 0.0
      %255 = vadd.xlane.f32.xlu0 %v254
      %v256 = vpop.xlane.xlu0 %255
      %v257 = vsel %vm47, %v253, 0.0
      %258 = vadd.xlane.f32.xlu0 %v257
      %v259 = vpop.xlane.xlu0 %258
      %v260 = vmul.f32 %v256, %v249
      %v261 = vmul.f32 %v259, %v249
      %v262 = vmul.f32 %v250, %v250
      %v263 = vmul.f32 %v251, %v251
      %v264 = vsub.f32 %v260, %v262
      %v265 = vsub.f32 %v261, %v263
      %v266 = vsub.f32 %v241, %v250
      %v267 = vsub.f32 %v242, %v251
      %v268 = vadd.f32 %v264, 1e-05
      %v269 = vadd.f32 %v265, 1e-05
      %v270 = vrsqrt.pop %v268
      %v271 = vrsqrt.pop %v269
      %v272 = vmul.f32 %v266, %v270
      %v273 = vmul.f32 %v267, %v271
      %v274 = vld [vmem:[%s5] sm:$0x1]
      %v276 = vlaneseq
      %v277 = vshrl.u32 %v276, 7
      %v278 = vsub.s32 0, %v277
      %v279 = vrot.slane %v274, %v278
      %v281 = vmul.f32 %v272, %v279
      %v282 = vmul.f32 %v273, %v279
      %v283 = vld [vmem:[%s6] sm:$0x1]
      %v285 = vlaneseq
      %v286 = vshrl.u32 %v285, 7
      %v287 = vsub.s32 0, %v286
      %v288 = vrot.slane %v283, %v287
      %v290 = vadd.f32 %v281, %v288
      %v291 = vadd.f32 %v282, %v288
      %292 = vst.msk [vmem:[#allocation3] sm:$0xff] %vm47, %v290
      %293 = vst.msk [vmem:[#allocation3 + $0x8] sm:$0xff] %vm47, %v291
    $region37: #{pos_wise_ffn.1} parent=1 // pred_fallthru
      _
    // Predicated region
    $region38: #{pos_wise_ffn.1} parent=1 // pred_check
      _
    $region39: #{pos_wise_ffn.1} parent=1 // pred_check_branch
      %295 = sbr.rel (0) target = $region41
    $region40: #{pos_wise_ffn.1} parent=1 // pred_region
      %s297 = ssub.s32 256, 256
      %298 = vsyncadd [#allocation4], %s297
      %s299 = sshll.u32 [#allocation3], 4
      %s300 = int_to_ptr.vmem [resolvable:$true] %s299
      %305 = dma.vmem_to_hbm [thread:$0]  %s300, 256, %s7, [#allocation4], 128, 128, 8
    $region41: #{pos_wise_ffn.1} parent=1 // pred_fallthru
      _
    // Predicated region
    $region42: #{pos_wise_ffn.1} parent=1 // pred_check
      _
    $region43: #{pos_wise_ffn.1} parent=1 // pred_check_branch
      %307 = sbr.rel (0) target = $region45
    $region44: #{pos_wise_ffn.1} parent=1 // pred_region
      %308 = dma.done [#allocation4], 256
    $region45: #{pos_wise_ffn.1} parent=1 // pred_fallthru
      _
    %309 = vsyncpa [#allocation4], 1

</llo_original>
